<compile_context>
chip_gen: v5e
topology: v5e:2x2
jax: 0.10.0
libtpu: 0.0.40
codegen_flags: <defaults>
</compile_context>

<pallas_src>
import functools

import jax
import jax.numpy as jnp
from jax.experimental import pallas as pl
from jax.experimental.pallas import tpu as pltpu


def domain_attention_kernel(x_ref, wfc1t_ref, bfc1_ref, w1_ref, b1_ref,
                            w2_ref, b2_ref, out_ref, *, true_hw):
    # x block: (Bt, C, HWp) in the input's native dtype (HWp = HW padded to 128).
    x = x_ref[...]

    # Global average pool (AdaptiveAvgPool2d(1)).  The f32 accumulation is
    # fused into the reduction (no explicit full-block astype), and we divide
    # by the *true* HW so zero padding of the lane axis is numerically inert.
    pooled = jnp.sum(x, axis=-1, dtype=jnp.float32) * (1.0 / true_hw)   # (Bt, C)

    # fc_1 gate: (Bt, C) @ (C, 2) + (1, 2), softmax over the 2 adapters.
    logits = jnp.dot(pooled, wfc1t_ref[...],
                     preferred_element_type=jnp.float32) + bfc1_ref[...]
    logits = logits - jnp.max(logits, axis=-1, keepdims=True)
    e = jnp.exp(logits)
    gate = e / jnp.sum(e, axis=-1, keepdims=True)                        # (Bt, 2)

    # Fused SE branches:
    #   h        = relu(pooled @ [W1_0^T | W1_1^T] + [b1_0 | b1_1])   (Bt, 2*hid)
    #   combined = (h * gate_per_branch) @ [[W2_0^T],[W2_1^T]] + gate @ b2
    # which equals sum_i gate_i * (relu(pooled @ W1_i^T + b1_i) @ W2_i^T + b2_i),
    # i.e. torch.matmul(SELayers_Matrix, weight).
    hid = b1_ref.shape[-1] // 2
    bt = pooled.shape[0]

    h = jnp.dot(pooled, w1_ref[...],
                preferred_element_type=jnp.float32) + b1_ref[...]       # (Bt, 2*hid)
    h = jnp.maximum(h, 0.0)
    gate_h = jnp.concatenate(
        [jnp.broadcast_to(gate[:, 0:1], (bt, hid)),
         jnp.broadcast_to(gate[:, 1:2], (bt, hid))], axis=-1)            # (Bt, 2*hid)
    combined = (jnp.dot(h * gate_h, w2_ref[...],
                        preferred_element_type=jnp.float32)
                + jnp.dot(gate, b2_ref[...],
                          preferred_element_type=jnp.float32))           # (Bt, C)

    scale = jax.nn.sigmoid(combined)

    # Final rescale in the input dtype; HWp is a multiple of 128, so the
    # output stores are unmasked lane-dense vst.
    out_ref[...] = x * scale[:, :, None].astype(x.dtype)


def _vmem_capacity_bytes():
    """Physical VMEM of the attached TPU generation (fallback: 128 MiB)."""
    try:
        info = pltpu.get_tpu_info()
        cap = getattr(info, "vmem_capacity_bytes", None)
        if cap:
            return int(cap)
    except Exception:
        pass
    return 128 << 20


def _pick_block_batch(B, img_bytes, block_budget, min_steps):
    """Largest divisor of B whose x block fits `block_budget` while leaving
    at least `min_steps` grid steps.  Falls back to bt=1 for huge images."""
    max_bt = max(1, block_budget // max(1, img_bytes))
    max_bt = min(max_bt, max(1, B // min_steps), B)
    bt = max(1, max_bt)
    while B % bt != 0:
        bt -= 1
    return bt


def domain_attention(x_nchw, params, block_batch=None):
    B, C, H, W = x_nchw.shape
    HW = H * W
    hid = params["w1"].shape[1]
    itemsize = jnp.dtype(x_nchw.dtype).itemsize

    # Keep x in its native dtype; pad the flattened spatial axis to a
    # multiple of 128 for lane-dense stores (pooling divides by the true HW).
    HWp = ((HW + 127) // 128) * 128
    x = x_nchw.reshape(B, C, HW)
    if HWp != HW:
        x = jnp.pad(x, ((0, 0), (0, 0), (0, HWp - HW)))

    # Weights in kernel-friendly row layouts; the two SE branches are
    # concatenated so the kernel issues one matmul per SE linear layer.
    f32 = jnp.float32
    wfc1t = params["wfc1"].astype(f32).T                                  # (C, 2)
    bfc1 = params["bfc1"].reshape(1, 2).astype(f32)                       # (1, 2)
    w1_cat = jnp.concatenate(
        [params["w1"][0].T, params["w1"][1].T], axis=1).astype(f32)       # (C, 2*hid)
    b1_cat = params["b1"].reshape(1, 2 * hid).astype(f32)                 # (1, 2*hid)
    w2_cat = jnp.concatenate(
        [params["w2"][0].T, params["w2"][1].T], axis=0).astype(f32)       # (2*hid, C)
    b2_mat = params["b2"].astype(f32)                                     # (2, C)

    # Generation-aware sizing: ~64 MiB VMEM => v7x-style (2 TensorCores),
    # 128 MiB => v5e/v6e (1 TensorCore, can afford bigger blocks).
    vmem_cap = _vmem_capacity_bytes()
    dual_tc = vmem_cap <= (64 << 20)
    block_budget = (6 << 20) if dual_tc else (14 << 20)
    vmem_cap_limit = (48 << 20) if dual_tc else (96 << 20)

    img_bytes = C * HWp * itemsize
    total_bytes = B * img_bytes
    # Only force multiple grid steps when megacore sharding is actually
    # worth it (dual-TC chip, enough data); otherwise one big block.
    min_steps = 4 if (dual_tc and total_bytes > (4 << 20)) else 1

    bt = block_batch if block_batch is not None else _pick_block_batch(
        B, img_bytes, block_budget, min_steps)
    assert B % bt == 0, "block_batch must divide the batch size"
    grid = (B // bt,)

    # VMEM: x block double-buffered for input and output, plus the (tiny,
    # also double-buffered) weights, plus internal-scratch headroom.
    block_bytes = bt * img_bytes
    weight_bytes = 4 * (wfc1t.size + bfc1.size + w1_cat.size + b1_cat.size
                        + w2_cat.size + b2_mat.size)
    needed = 4 * block_bytes + 2 * weight_bytes + (2 << 20)
    if needed <= vmem_cap_limit:
        vmem_limit = int(min(max(needed, 32 << 20), vmem_cap_limit))
    else:
        # bt is already 1 (a single image exceeds the budget): never clamp
        # below what the pipeline needs; request it, bounded by physical VMEM.
        # TODO(synk): switch to an HW-tiled / single-buffered (pl.Buffered(1))
        # scheme for feature maps too large to double-buffer on v7x.
        vmem_limit = int(min(needed, int(vmem_cap * 0.9)))

    kernel = functools.partial(domain_attention_kernel, true_hw=float(HW))

    out = pl.pallas_call(
        kernel,
        out_shape=jax.ShapeDtypeStruct((B, C, HWp), x.dtype),
        grid_spec=pltpu.PrefetchScalarGridSpec(
            num_scalar_prefetch=0,
            grid=grid,
            in_specs=[
                pl.BlockSpec((bt, C, HWp), lambda b: (b, 0, 0)),
                # TODO(synk): mark these constant weight specs with
                # pipeline_mode=pl.Buffered(1) (index_map never changes) once
                # confirmed supported on the deployment jax version.
                pl.BlockSpec((C, 2), lambda b: (0, 0)),
                pl.BlockSpec((1, 2), lambda b: (0, 0)),
                pl.BlockSpec((C, 2 * hid), lambda b: (0, 0)),
                pl.BlockSpec((1, 2 * hid), lambda b: (0, 0)),
                pl.BlockSpec((2 * hid, C), lambda b: (0, 0)),
                pl.BlockSpec((2, C), lambda b: (0, 0)),
            ],
            out_specs=pl.BlockSpec((bt, C, HWp), lambda b: (b, 0, 0)),
        ),
        compiler_params=pltpu.CompilerParams(
            dimension_semantics=("parallel",),
            vmem_limit_bytes=vmem_limit),
        # TODO(synk): pass input_output_aliases={0: 0} when the caller no
        # longer needs x, to reuse its HBM buffer for the output.
    )(x, wfc1t, bfc1, w1_cat, b1_cat, w2_cat, b2_mat)

    if HWp != HW:
        out = out[:, :, :HW]
    return out.reshape(B, C, H, W)


def domain_attention_ref(x, params):
    """Pure-JAX reference mirroring the PyTorch forward exactly."""
    B, C, H, W = x.shape
    pooled = x.astype(jnp.float32).mean(axis=(2, 3))               # (B, C)
    logits = pooled @ params["wfc1"].T + params["bfc1"]            # (B, 2)
    gate = jax.nn.softmax(logits, axis=1)                          # (B, 2)
    ses = []
    for i in range(2):
        h = jax.nn.relu(pooled @ params["w1"][i].T + params["b1"][i])
        ses.append(h @ params["w2"][i].T + params["b2"][i])        # (B, C)
    se_mat = jnp.stack(ses, axis=2)                                # (B, C, 2)
    comb = jnp.einsum("bcn,bn->bc", se_mat, gate)                  # (B, C)
    scale = jax.nn.sigmoid(comb)
    return (x * scale[:, :, None, None].astype(x.dtype)).astype(x.dtype)


def init_params(key, planes, reduction=16):
    hid = planes // reduction
    keys = jax.random.split(key, 6)
    scale = 0.1
    return {
        "wfc1": scale * jax.random.normal(keys[0], (2, planes), jnp.float32),
        "bfc1": scale * jax.random.normal(keys[1], (2,), jnp.float32),
        "w1": scale * jax.random.normal(keys[2], (2, hid, planes), jnp.float32),
        "b1": scale * jax.random.normal(keys[3], (2, hid), jnp.float32),
        "w2": scale * jax.random.normal(keys[4], (2, planes, hid), jnp.float32),
        "b2": scale * jax.random.normal(keys[5], (2, planes), jnp.float32),
    }


if __name__ == "__main__":
    B, C, H, W = 2, 32, 16, 16           # planes=32, reduction=16 -> hidden=2
    key = jax.random.PRNGKey(0)
    kx, kp = jax.random.split(key)
    x = jax.random.normal(kx, (B, C, H, W), jnp.float32)
    params = init_params(kp, C, reduction=16)

    out = domain_attention(x, params)
    out = jax.block_until_ready(out)

    ref = domain_attention_ref(x, params)
    assert out.shape == (B, C, H, W)
    assert jnp.allclose(out, ref, rtol=1e-5, atol=1e-5), "mismatch vs reference"

    print("KERNEL_OK")
</pallas_src>

<mosaic_0001>
module attributes {stable_mosaic.version = 11 : i64} {
  func.func @domain_attention_kernel(%arg0: i32, %arg1: memref<2x32x256xf32, #tpu.memory_space<vmem>>, %arg2: memref<32x2xf32, #tpu.memory_space<vmem>>, %arg3: memref<1x2xf32, #tpu.memory_space<vmem>>, %arg4: memref<32x4xf32, #tpu.memory_space<vmem>>, %arg5: memref<1x4xf32, #tpu.memory_space<vmem>>, %arg6: memref<4x32xf32, #tpu.memory_space<vmem>>, %arg7: memref<2x32xf32, #tpu.memory_space<vmem>>, %arg8: memref<2x32x256xf32, #tpu.memory_space<vmem>>) attributes {dimension_semantics = [#tpu.dimension_semantics<parallel>], iteration_bounds = array<i64: 1>, scalar_prefetch = 0 : i64, scratch_operands = 0 : i64, tpu.core_type = #tpu.core_type<tc>, window_params = [{transform_indices = @transform_0, window_bounds = array<i64: 2, 32, 256>}, {pipeline_mode = #tpu.pipeline_mode<synchronous>, transform_indices = @transform_1, window_bounds = array<i64: 32, 2>}, {pipeline_mode = #tpu.pipeline_mode<synchronous>, transform_indices = @transform_2, window_bounds = array<i64: 1, 2>}, {pipeline_mode = #tpu.pipeline_mode<synchronous>, transform_indices = @transform_3, window_bounds = array<i64: 32, 4>}, {pipeline_mode = #tpu.pipeline_mode<synchronous>, transform_indices = @transform_4, window_bounds = array<i64: 1, 4>}, {pipeline_mode = #tpu.pipeline_mode<synchronous>, transform_indices = @transform_5, window_bounds = array<i64: 4, 32>}, {pipeline_mode = #tpu.pipeline_mode<synchronous>, transform_indices = @transform_6, window_bounds = array<i64: 2, 32>}, {transform_indices = @transform_7, window_bounds = array<i64: 2, 32, 256>}]} {
    %c0 = arith.constant 0 : index
    %c0_0 = arith.constant 0 : index
    %c0_1 = arith.constant 0 : index
    %0 = vector.load %arg1[%c0, %c0_0, %c0_1] : memref<2x32x256xf32, #tpu.memory_space<vmem>>, vector<2x32x256xf32>
    %cst = arith.constant dense<0.000000e+00> : vector<2x32xf32>
    %1 = vector.multi_reduction <add>, %0, %cst [2] : vector<2x32x256xf32> to vector<2x32xf32>
    %cst_2 = arith.constant 3.906250e-03 : f32
    %2 = vector.broadcast %cst_2 : f32 to vector<2x32xf32>
    %3 = arith.mulf %1, %2 : vector<2x32xf32>
    %c0_3 = arith.constant 0 : index
    %c0_4 = arith.constant 0 : index
    %4 = vector.load %arg2[%c0_3, %c0_4] : memref<32x2xf32, #tpu.memory_space<vmem>>, vector<32x2xf32>
    %cst_5 = arith.constant dense<0.000000e+00> : vector<2x2xf32>
    %5 = tpu.matmul %3, %4, %cst_5 {dimension_numbers = #tpu.dot_dimension_numbers<[1], [0], [0], [1], [0, 0, 1, 1], [], []>} : vector<2x32xf32>, vector<32x2xf32>, vector<2x2xf32> -> vector<2x2xf32>
    %c0_6 = arith.constant 0 : index
    %c0_7 = arith.constant 0 : index
    %6 = vector.load %arg3[%c0_6, %c0_7] : memref<1x2xf32, #tpu.memory_space<vmem>>, vector<1x2xf32>
    %7 = vector.broadcast %6 : vector<1x2xf32> to vector<2x2xf32>
    %8 = arith.addf %5, %7 : vector<2x2xf32>
    %cst_8 = arith.constant dense<0xFF800000> : vector<2xf32>
    %9 = vector.multi_reduction <maximumf>, %8, %cst_8 [1] : vector<2x2xf32> to vector<2xf32>
    %10 = vector.shape_cast %9 : vector<2xf32> to vector<2x1xf32>
    %11 = vector.broadcast %10 : vector<2x1xf32> to vector<2x2xf32>
    %12 = arith.subf %8, %11 : vector<2x2xf32>
    %13 = math.exp %12 : vector<2x2xf32>
    %cst_9 = arith.constant dense<0.000000e+00> : vector<2xf32>
    %14 = vector.multi_reduction <add>, %13, %cst_9 [1] : vector<2x2xf32> to vector<2xf32>
    %15 = vector.shape_cast %14 : vector<2xf32> to vector<2x1xf32>
    %16 = vector.broadcast %15 : vector<2x1xf32> to vector<2x2xf32>
    %17 = arith.divf %13, %16 : vector<2x2xf32>
    %c0_10 = arith.constant 0 : index
    %c0_11 = arith.constant 0 : index
    %18 = vector.load %arg4[%c0_10, %c0_11] : memref<32x4xf32, #tpu.memory_space<vmem>>, vector<32x4xf32>
    %cst_12 = arith.constant dense<0.000000e+00> : vector<2x4xf32>
    %19 = tpu.matmul %3, %18, %cst_12 {dimension_numbers = #tpu.dot_dimension_numbers<[1], [0], [0], [1], [0, 0, 1, 1], [], []>} : vector<2x32xf32>, vector<32x4xf32>, vector<2x4xf32> -> vector<2x4xf32>
    %c0_13 = arith.constant 0 : index
    %c0_14 = arith.constant 0 : index
    %20 = vector.load %arg5[%c0_13, %c0_14] : memref<1x4xf32, #tpu.memory_space<vmem>>, vector<1x4xf32>
    %21 = vector.broadcast %20 : vector<1x4xf32> to vector<2x4xf32>
    %22 = arith.addf %19, %21 : vector<2x4xf32>
    %cst_15 = arith.constant 0.000000e+00 : f32
    %23 = vector.broadcast %cst_15 : f32 to vector<2x4xf32>
    %24 = arith.maximumf %22, %23 : vector<2x4xf32>
    %25 = vector.extract_strided_slice %17 {offsets = [0, 0], sizes = [2, 1], strides = [1, 1]} : vector<2x2xf32> to vector<2x1xf32>
    %26 = vector.shape_cast %25 : vector<2x1xf32> to vector<2x1xf32>
    %27 = vector.broadcast %26 : vector<2x1xf32> to vector<2x2xf32>
    %28 = vector.extract_strided_slice %17 {offsets = [0, 1], sizes = [2, 1], strides = [1, 1]} : vector<2x2xf32> to vector<2x1xf32>
    %29 = vector.shape_cast %28 : vector<2x1xf32> to vector<2x1xf32>
    %30 = vector.broadcast %29 : vector<2x1xf32> to vector<2x2xf32>
    %31 = tpu.concatenate %27, %30 in 1 : vector<2x2xf32>, vector<2x2xf32> -> vector<2x4xf32>
    %32 = arith.mulf %24, %31 : vector<2x4xf32>
    %c0_16 = arith.constant 0 : index
    %c0_17 = arith.constant 0 : index
    %33 = vector.load %arg6[%c0_16, %c0_17] : memref<4x32xf32, #tpu.memory_space<vmem>>, vector<4x32xf32>
    %cst_18 = arith.constant dense<0.000000e+00> : vector<2x32xf32>
    %34 = tpu.matmul %32, %33, %cst_18 {dimension_numbers = #tpu.dot_dimension_numbers<[1], [0], [0], [1], [0, 0, 1, 1], [], []>} : vector<2x4xf32>, vector<4x32xf32>, vector<2x32xf32> -> vector<2x32xf32>
    %c0_19 = arith.constant 0 : index
    %c0_20 = arith.constant 0 : index
    %35 = vector.load %arg7[%c0_19, %c0_20] : memref<2x32xf32, #tpu.memory_space<vmem>>, vector<2x32xf32>
    %cst_21 = arith.constant dense<0.000000e+00> : vector<2x32xf32>
    %36 = tpu.matmul %17, %35, %cst_21 {dimension_numbers = #tpu.dot_dimension_numbers<[1], [0], [0], [1], [0, 0, 1, 1], [], []>} : vector<2x2xf32>, vector<2x32xf32>, vector<2x32xf32> -> vector<2x32xf32>
    %37 = arith.addf %34, %36 : vector<2x32xf32>
    %38 = arith.negf %37 : vector<2x32xf32>
    %39 = math.exp %38 : vector<2x32xf32>
    %cst_22 = arith.constant 1.000000e+00 : f32
    %40 = vector.broadcast %cst_22 : f32 to vector<2x32xf32>
    %41 = arith.addf %40, %39 : vector<2x32xf32>
    %42 = arith.divf %40, %41 : vector<2x32xf32>
    %43 = vector.shape_cast %42 : vector<2x32xf32> to vector<2x32x1xf32>
    %44 = vector.broadcast %43 : vector<2x32x1xf32> to vector<2x32x256xf32>
    %45 = arith.mulf %0, %44 : vector<2x32x256xf32>
    %c0_23 = arith.constant 0 : index
    %c0_24 = arith.constant 0 : index
    %c0_25 = arith.constant 0 : index
    %46 = vector.load %arg8[%c0_23, %c0_24, %c0_25] : memref<2x32x256xf32, #tpu.memory_space<vmem>>, vector<2x32x256xf32>
    tpu.vector_store %arg8[%c0_23, %c0_24, %c0_25], %45 {strides = array<i32>} : memref<2x32x256xf32, #tpu.memory_space<vmem>>, vector<2x32x256xf32>,
    return
  }
  func.func @transform_0(%arg0: i32) -> (i32, i32, i32) {
    %c0_i32 = arith.constant 0 : i32
    %c0_i32_0 = arith.constant 0 : i32
    %c0_i32_1 = arith.constant 0 : i32
    return %arg0, %c0_i32, %c0_i32_0 : i32, i32, i32
  }
  func.func @transform_1(%arg0: i32) -> (i32, i32) {
    %c0_i32 = arith.constant 0 : i32
    %c0_i32_0 = arith.constant 0 : i32
    %c0_i32_1 = arith.constant 0 : i32
    return %c0_i32, %c0_i32_0 : i32, i32
  }
  func.func @transform_2(%arg0: i32) -> (i32, i32) {
    %c0_i32 = arith.constant 0 : i32
    %c0_i32_0 = arith.constant 0 : i32
    %c0_i32_1 = arith.constant 0 : i32
    return %c0_i32, %c0_i32_0 : i32, i32
  }
  func.func @transform_3(%arg0: i32) -> (i32, i32) {
    %c0_i32 = arith.constant 0 : i32
    %c0_i32_0 = arith.constant 0 : i32
    %c0_i32_1 = arith.constant 0 : i32
    return %c0_i32, %c0_i32_0 : i32, i32
  }
  func.func @transform_4(%arg0: i32) -> (i32, i32) {
    %c0_i32 = arith.constant 0 : i32
    %c0_i32_0 = arith.constant 0 : i32
    %c0_i32_1 = arith.constant 0 : i32
    return %c0_i32, %c0_i32_0 : i32, i32
  }
  func.func @transform_5(%arg0: i32) -> (i32, i32) {
    %c0_i32 = arith.constant 0 : i32
    %c0_i32_0 = arith.constant 0 : i32
    %c0_i32_1 = arith.constant 0 : i32
    return %c0_i32, %c0_i32_0 : i32, i32
  }
  func.func @transform_6(%arg0: i32) -> (i32, i32) {
    %c0_i32 = arith.constant 0 : i32
    %c0_i32_0 = arith.constant 0 : i32
    %c0_i32_1 = arith.constant 0 : i32
    return %c0_i32, %c0_i32_0 : i32, i32
  }
  func.func @transform_7(%arg0: i32) -> (i32, i32, i32) {
    %c0_i32 = arith.constant 0 : i32
    %c0_i32_0 = arith.constant 0 : i32
    %c0_i32_1 = arith.constant 0 : i32
    return %arg0, %c0_i32, %c0_i32_0 : i32, i32, i32
  }
}

</mosaic_0001>

<llo_original>
// kernel: tpu_custom_call.1
$region0: #{tpu_custom_call.1}
  #allocation0 [shape = 'u32[]', space=smem, size = 0x4, offset = 0x4, fixed_abs, tag = 'smem constant byte address 0x4 - core index']
  #allocation1 [shape = 'u32[72,128]{1,0:T(1,128)}', space=vmem, size = 0x9000, scoped, tag = 'internal scratch']
  %s0 = inlined_call_operand.hbm [shape: f32[2,32,256], index: 0, kind: input, shape index: {}]
  %s1 = inlined_call_operand.vmem [shape: f32[32,2], index: 1, kind: input, shape index: {}]
  %s2 = inlined_call_operand.vmem [shape: f32[1,2], index: 2, kind: input, shape index: {}]
  %s3 = inlined_call_operand.vmem [shape: f32[32,4], index: 3, kind: input, shape index: {}]
  %s4 = inlined_call_operand.vmem [shape: f32[1,4], index: 4, kind: input, shape index: {}]
  %s5 = inlined_call_operand.vmem [shape: f32[4,32], index: 5, kind: input, shape index: {}]
  %s6 = inlined_call_operand.vmem [shape: f32[2,32], index: 6, kind: input, shape index: {}]
  %s7 = inlined_call_operand.hbm [shape: f32[2,32,256], index: 7, kind: output, shape index: {}]
  %s8 = sld [smem:[#allocation0]]
  $region42: #{tpu_custom_call.1} parent=0
    _
  %s10 = ssub.s32 1, %s8
  %s11 = scalar_select 0, %s10, %s8
  $region1: #{tpu_custom_call.1} parent=0
    #allocation2 [shape = 'u8[65536]{0}', space=vmem, size = 0x10000, scoped, tag = 'input window, operand 0, single buffered']
    #allocation3 [shape = 's32[1]{0}', space=sflag, size = 0x4, scoped, tag = 'scoped memory for tpu_custom_call.1']
    #allocation4 [shape = 's32[1]{0}', space=sflag, size = 0x4, scoped, tag = 'scoped memory for tpu_custom_call.1']
    #allocation5 [shape = 'u8[65536]{0}', space=vmem, size = 0x10000, scoped, tag = 'output window, operand 0, single buffered']
    %12 = vsyncpa [#allocation3], 0
    %13 = vsyncpa [#allocation4], 0
    // Predicated region
    $region2: #{tpu_custom_call.1} parent=1 // pred_check
      _
    $region3: #{tpu_custom_call.1} parent=1 // pred_check_branch
      %15 = sbr.rel (0) target = $region5
    $region4: #{tpu_custom_call.1} parent=1 // pred_region
      %17 = vsyncadd [#allocation3], 0
      %s18 = sshll.u32 %s0, 4
      %s19 = int_to_ptr.hbm [resolvable:$true] %s18
      %s20 = sshll.u32 [#allocation2], 4
      %s21 = int_to_ptr.vmem [resolvable:$true] %s20
      %26 = dma.hbm_to_vmem [thread:$0]  %s19, 2048, %s21, [#allocation3], 256, 256, 16
    $region5: #{tpu_custom_call.1} parent=1 // pred_fallthru
      _
    // Predicated region
    $region6: #{tpu_custom_call.1} parent=1 // pred_check
      _
    $region7: #{tpu_custom_call.1} parent=1 // pred_check_branch
      %28 = sbr.rel (0) target = $region9
    $region8: #{tpu_custom_call.1} parent=1 // pred_region
      _
    $region9: #{tpu_custom_call.1} parent=1 // pred_fallthru
      _
    // Predicated region
    $region10: #{tpu_custom_call.1} parent=1 // pred_check
      _
    $region11: #{tpu_custom_call.1} parent=1 // pred_check_branch
      %30 = sbr.rel (0) target = $region13
    $region12: #{tpu_custom_call.1} parent=1 // pred_region
      _
    $region13: #{tpu_custom_call.1} parent=1 // pred_fallthru
      _
    // Predicated region
    $region14: #{tpu_custom_call.1} parent=1 // pred_check
      _
    $region15: #{tpu_custom_call.1} parent=1 // pred_check_branch
      %32 = sbr.rel (0) target = $region17
    $region16: #{tpu_custom_call.1} parent=1 // pred_region
      _
    $region17: #{tpu_custom_call.1} parent=1 // pred_fallthru
      _
    // Predicated region
    $region18: #{tpu_custom_call.1} parent=1 // pred_check
      _
    $region19: #{tpu_custom_call.1} parent=1 // pred_check_branch
      %34 = sbr.rel (0) target = $region21
    $region20: #{tpu_custom_call.1} parent=1 // pred_region
      _
    $region21: #{tpu_custom_call.1} parent=1 // pred_fallthru
      _
    // Predicated region
    $region22: #{tpu_custom_call.1} parent=1 // pred_check
      _
    $region23: #{tpu_custom_call.1} parent=1 // pred_check_branch
      %36 = sbr.rel (0) target = $region25
    $region24: #{tpu_custom_call.1} parent=1 // pred_region
      _
    $region25: #{tpu_custom_call.1} parent=1 // pred_fallthru
      _
    // Predicated region
    $region26: #{tpu_custom_call.1} parent=1 // pred_check
      _
    $region27: #{tpu_custom_call.1} parent=1 // pred_check_branch
      %38 = sbr.rel (0) target = $region29
    $region28: #{tpu_custom_call.1} parent=1 // pred_region
      _
    $region29: #{tpu_custom_call.1} parent=1 // pred_fallthru
      _
    // Predicated region
    $region30: #{tpu_custom_call.1} parent=1 // pred_check
      _
    $region31: #{tpu_custom_call.1} parent=1 // pred_check_branch
      %40 = sbr.rel (0) target = $region33
    $region32: #{tpu_custom_call.1} parent=1 // pred_region
      %42 = dma.done [#allocation3], 2048
    $region33: #{tpu_custom_call.1} parent=1 // pred_fallthru
      _
    %v43 = vld [vmem:[#allocation2] sm:$0xff]
    %v44 = vld [vmem:[#allocation2 + $0x8] sm:$0xff]
    %v45 = vld [vmem:[#allocation2 + $0x10] sm:$0xff]
    %v46 = vld [vmem:[#allocation2 + $0x18] sm:$0xff]
    %v47 = vld [vmem:[#allocation2 + $0x20] sm:$0xff]
    %v48 = vld [vmem:[#allocation2 + $0x28] sm:$0xff]
    %v49 = vld [vmem:[#allocation2 + $0x30] sm:$0xff]
    %v50 = vld [vmem:[#allocation2 + $0x38] sm:$0xff]
    %v51 = vld [vmem:[#allocation2 + $0x40] sm:$0xff]
    %v52 = vld [vmem:[#allocation2 + $0x48] sm:$0xff]
    %v53 = vld [vmem:[#allocation2 + $0x50] sm:$0xff]
    %v54 = vld [vmem:[#allocation2 + $0x58] sm:$0xff]
    %v55 = vld [vmem:[#allocation2 + $0x60] sm:$0xff]
    %v56 = vld [vmem:[#allocation2 + $0x68] sm:$0xff]
    %v57 = vld [vmem:[#allocation2 + $0x70] sm:$0xff]
    %v58 = vld [vmem:[#allocation2 + $0x78] sm:$0xff]
    %v59 = vadd.f32 %v43, %v44
    %60 = vadd.xlane.f32.xlu0 %v59
    %v61 = vpop.xlane.xlu0 %60
    %v62 = vadd.f32 %v45, %v46
    %63 = vadd.xlane.f32.xlu0 %v62
    %v64 = vpop.xlane.xlu0 %63
    %v65 = vadd.f32 %v47, %v48
    %66 = vadd.xlane.f32.xlu0 %v65
    %v67 = vpop.xlane.xlu0 %66
    %v68 = vadd.f32 %v49, %v50
    %69 = vadd.xlane.f32.xlu0 %v68
    %v70 = vpop.xlane.xlu0 %69
    %v71 = vadd.f32 %v51, %v52
    %72 = vadd.xlane.f32.xlu0 %v71
    %v73 = vpop.xlane.xlu0 %72
    %v74 = vadd.f32 %v53, %v54
    %75 = vadd.xlane.f32.xlu0 %v74
    %v76 = vpop.xlane.xlu0 %75
    %v77 = vadd.f32 %v55, %v56
    %78 = vadd.xlane.f32.xlu0 %v77
    %v79 = vpop.xlane.xlu0 %78
    %v80 = vadd.f32 %v57, %v58
    %81 = vadd.xlane.f32.xlu0 %v80
    %v82 = vpop.xlane.xlu0 %81
    %v83 = vmul.f32 %v61, 0.00390625
    %v84 = vmul.f32 %v64, 0.00390625
    %v85 = vmul.f32 %v67, 0.00390625
    %v86 = vmul.f32 %v70, 0.00390625
    %v87 = vmul.f32 %v73, 0.00390625
    %v88 = vmul.f32 %v76, 0.00390625
    %v89 = vmul.f32 %v79, 0.00390625
    %v90 = vmul.f32 %v82, 0.00390625
    %v91 = vld [vmem:[%s1] sm:$0xff]
    %v92 = vld [vmem:[%s1 + $0x8] sm:$0xff]
    %v93 = vld [vmem:[%s1 + $0x10] sm:$0xff]
    %v94 = vld [vmem:[%s1 + $0x18] sm:$0xff]
    %v95 = vld [vmem:[%s2] sm:$0x1]
    %v97 = vperm.slane %v95, 0
    %v107 = vlaneseq
    %v108 = vand.u32 %v107, 127
    %v109 = vperm.slane %v83, %v108
    %v110 = vadd.s32 %v108, 4294967288
    %v111 = vperm.slane %v84, %v110
    %vm112 = vcmask 130112
    %v113 = vsel %vm112, %v111, %v109
    %v114 = vadd.s32 %v108, 4294967280
    %v115 = vperm.slane %v85, %v114
    %vm116 = vcmask 195712
    %v117 = vsel %vm116, %v115, %v113
    %v118 = vadd.s32 %v108, 4294967272
    %v119 = vperm.slane %v86, %v118
    %vm120 = vcmask 261312
    %v121 = vsel %vm120, %v119, %v117
    %v122 = vperm.slane %v87, %v108
    %v123 = vperm.slane %v88, %v110
    %v124 = vsel %vm112, %v123, %v122
    %v125 = vperm.slane %v89, %v114
    %v126 = vsel %vm116, %v125, %v124
    %v127 = vperm.slane %v90, %v118
    %v128 = vsel %vm120, %v127, %v126
    %vm129 = vcmask 1041409
    %v130 = vsel %vm129, %v128, %v121
    %vm131 = vcmask 261120
    %v132 = vsel %vm131, %v130, 0
    %134 = vmatpush.msra.mxu0 0.0
    %135 = vmatpush.msra.mxu0 0.0
    %136 = vmatpush.msra.mxu0 0.0
    %137 = vmatpush.msra.mxu0 0.0
    %138 = vmatpush.msra.mxu0 0.0
    %139 = vmatpush.msra.mxu0 0.0
    %140 = vmatpush.msra.mxu0 0.0
    %141 = vmatpush.msra.mxu0 0.0
    %142 = vmatpush.msra.mxu0 0.0
    %143 = vmatpush.msra.mxu0 0.0
    %144 = vmatpush.msra.mxu0 0.0
    %145 = vmatpush.msra.mxu0 0.0
    %146 = vmatpush.msra.mxu0 %v94
    %147 = vmatpush.msra.mxu0 %v93
    %148 = vmatpush.msra.mxu0 %v92
    %149 = vmatpush.msra.mxu0 %v91
    %150 = vmatmul.f32.gmra.mxu0 %v132
    %v151 = vpop.f32.mrf.mxu0
    %v152 = vadd.f32 %v97, %v151
    %153 = vdwg.mxu0
    %vm154 = vcmask 9216
    %v155 = vsel %vm154, %v152, -inf
    %156 = vmax.xlane.f32.xlu0 %v155
    %v157 = vpop.xlane.xlu0 %156
    %v158 = vsub.f32 %v152, %v157
    %v159 = vmul.f32 %v158, 1.442695
    %v160 = vpow.pop %v159
    %v161 = vsel %vm154, %v160, 0.0
    %162 = vadd.xlane.f32.xlu0 %v161
    %v163 = vpop.xlane.xlu0 %162
    %v164 = vrcp.pop %v163
    %v165 = vmul.f32 %v163, %v164
    %v166 = vsub.f32 1.0, %v165
    %v167 = vmul.f32 %v164, %v166
    %v168 = vadd.f32 %v164, %v167
    %vm169 = vweird.f32 %v163
    %vm170 = vweird.f32 %v164
    %vm171 = vmor %vm169, %vm170
    %v172 = vsel %vm171, %v164, %v168
    %v173 = vand.u32 2147483647, %v163
    %vm174 = vcmp.eq.f32.partialorder %v173, 8.507059e+37
    %v175 = vand.u32 %v163, 2147483648
    %v176 = vor.u32 1.1754944e-38, %v175
    %v177 = vsel %vm174, %v176, %v172
    %v178 = vmul.f32 %v160, %v177
    %v179 = vld [vmem:[%s3] sm:$0xff]
    %v180 = vld [vmem:[%s3 + $0x8] sm:$0xff]
    %v181 = vld [vmem:[%s3 + $0x10] sm:$0xff]
    %v182 = vld [vmem:[%s3 + $0x18] sm:$0xff]
    %v183 = vld [vmem:[%s4] sm:$0x1]
    %v185 = vperm.slane %v183, 0
    %187 = vmatpush.msra.mxu0 0.0
    %188 = vmatpush.msra.mxu0 0.0
    %189 = vmatpush.msra.mxu0 0.0
    %190 = vmatpush.msra.mxu0 0.0
    %191 = vmatpush.msra.mxu0 0.0
    %192 = vmatpush.msra.mxu0 0.0
    %193 = vmatpush.msra.mxu0 0.0
    %194 = vmatpush.msra.mxu0 0.0
    %195 = vmatpush.msra.mxu0 0.0
    %196 = vmatpush.msra.mxu0 0.0
    %197 = vmatpush.msra.mxu0 0.0
    %198 = vmatpush.msra.mxu0 0.0
    %199 = vmatpush.msra.mxu0 %v182
    %200 = vmatpush.msra.mxu0 %v181
    %201 = vmatpush.msra.mxu0 %v180
    %202 = vmatpush.msra.mxu0 %v179
    %203 = vmatmul.f32.gmra.mxu0 %v132
    %v204 = vpop.f32.mrf.mxu0
    %v205 = vadd.f32 %v185, %v204
    %206 = vdwg.mxu0
    %v207 = vmax.f32 %v205, 0.0
    %209 = vset.pattern.permute.xlu0 0
    %210 = vperm.xlu0 %209, %v178
    %v211 = vpop.permute.xlu0 %210
    %213 = vset.pattern.permute.xlu0 1
    %214 = vperm.xlu0 %213, %v178
    %v215 = vpop.permute.xlu0 %214
    %vm217 = vcmask 15360
    %v218 = vsel %vm217, %v211, %v215
    %v219 = vmul.f32 %v207, %v218
    %v220 = vld [vmem:[%s5] sm:$0xf]
    %v221 = vld [vmem:[%s6] sm:$0x3]
    %v222 = vsel %vm217, %v178, 0
    %vm224 = vcmask 1041408
    %v226 = vsel %vm224, %v221, 0
    %228 = vmatpush.msra.mxu0 0.0
    %229 = vmatpush.msra.mxu0 0.0
    %230 = vmatpush.msra.mxu0 0.0
    %231 = vmatpush.msra.mxu0 0.0
    %232 = vmatpush.msra.mxu0 0.0
    %233 = vmatpush.msra.mxu0 0.0
    %234 = vmatpush.msra.mxu0 0.0
    %235 = vmatpush.msra.mxu0 0.0
    %236 = vmatpush.msra.mxu0 0.0
    %237 = vmatpush.msra.mxu0 0.0
    %238 = vmatpush.msra.mxu0 0.0
    %239 = vmatpush.msra.mxu0 0.0
    %240 = vmatpush.msra.mxu0 0.0
    %241 = vmatpush.msra.mxu0 0.0
    %242 = vmatpush.msra.mxu0 0.0
    %243 = vmatpush.msra.mxu0 %v226
    %244 = vmatmul.f32.gmra.mxu0 %v222
    %v245 = vpop.f32.mrf.mxu0
    %v246 = vadd.f32 0.0, %v245
    %247 = vdwg.mxu0
    %vm248 = vcmask 31744
    %v250 = vsel %vm248, %v219, 0
    %vm252 = vcmask 1043456
    %v254 = vsel %vm252, %v220, 0
    %256 = vmatpush.msra.mxu0 0.0
    %257 = vmatpush.msra.mxu0 0.0
    %258 = vmatpush.msra.mxu0 0.0
    %259 = vmatpush.msra.mxu0 0.0
    %260 = vmatpush.msra.mxu0 0.0
    %261 = vmatpush.msra.mxu0 0.0
    %262 = vmatpush.msra.mxu0 0.0
    %263 = vmatpush.msra.mxu0 0.0
    %264 = vmatpush.msra.mxu0 0.0
    %265 = vmatpush.msra.mxu0 0.0
    %266 = vmatpush.msra.mxu0 0.0
    %267 = vmatpush.msra.mxu0 0.0
    %268 = vmatpush.msra.mxu0 0.0
    %269 = vmatpush.msra.mxu0 0.0
    %270 = vmatpush.msra.mxu0 0.0
    %271 = vmatpush.msra.mxu0 %v254
    %272 = vmatmul.f32.gmra.mxu0 %v250
    %v273 = vpop.f32.mrf.mxu0
    %v274 = vadd.f32 %v246, %v273
    %275 = vdwg.mxu0
    %v276 = vxor.u32 %v274, 2147483648
    %v277 = vmul.f32 %v276, 1.442695
    %v278 = vpow.pop %v277
    %v279 = vadd.f32 %v278, 1.0
    %v280 = vrcp.pop %v279
    %v281 = vmul.f32 %v279, %v280
    %v282 = vsub.f32 1.0, %v281
    %v283 = vmul.f32 %v280, %v282
    %v284 = vadd.f32 %v280, %v283
    %vm285 = vweird.f32 %v279
    %vm286 = vweird.f32 %v280
    %vm287 = vmor %vm285, %vm286
    %v288 = vsel %vm287, %v280, %v284
    %v289 = vand.u32 2147483647, %v279
    %vm290 = vcmp.eq.f32.partialorder %v289, 8.507059e+37
    %v291 = vand.u32 %v279, 2147483648
    %v292 = vor.u32 1.1754944e-38, %v291
    %v293 = vsel %vm290, %v292, %v288
    %v294 = vmul.f32 1.0, %v293
    %v295 = vperm.slane %v294, 0
    %v296 = vlaneseq
    %v297 = vshrl.u32 %v296, 7
    %299 = vset.pattern.permute.xlu0 %v297
    %300 = vperm.xlu0 %299, %v295
    %v301 = vpop.permute.xlu0 %300
    %v302 = vlaneseq
    %v303 = vshrl.u32 %v302, 7
    %v304 = vadd.s32 %v303, 8
    %305 = vset.pattern.permute.xlu0 %v304
    %306 = vperm.xlu0 %305, %v295
    %v307 = vpop.permute.xlu0 %306
    %v308 = vlaneseq
    %v309 = vshrl.u32 %v308, 7
    %v310 = vadd.s32 %v309, 16
    %311 = vset.pattern.permute.xlu0 %v310
    %312 = vperm.xlu0 %311, %v295
    %v313 = vpop.permute.xlu0 %312
    %v314 = vlaneseq
    %v315 = vshrl.u32 %v314, 7
    %v316 = vadd.s32 %v315, 24
    %317 = vset.pattern.permute.xlu0 %v316
    %318 = vperm.xlu0 %317, %v295
    %v319 = vpop.permute.xlu0 %318
    %v320 = vperm.slane %v294, 1
    %v321 = vlaneseq
    %v322 = vshrl.u32 %v321, 7
    %324 = vset.pattern.permute.xlu0 %v322
    %325 = vperm.xlu0 %324, %v320
    %v326 = vpop.permute.xlu0 %325
    %v327 = vlaneseq
    %v328 = vshrl.u32 %v327, 7
    %v329 = vadd.s32 %v328, 8
    %330 = vset.pattern.permute.xlu0 %v329
    %331 = vperm.xlu0 %330, %v320
    %v332 = vpop.permute.xlu0 %331
    %v333 = vlaneseq
    %v334 = vshrl.u32 %v333, 7
    %v335 = vadd.s32 %v334, 16
    %336 = vset.pattern.permute.xlu0 %v335
    %337 = vperm.xlu0 %336, %v320
    %v338 = vpop.permute.xlu0 %337
    %v339 = vlaneseq
    %v340 = vshrl.u32 %v339, 7
    %v341 = vadd.s32 %v340, 24
    %342 = vset.pattern.permute.xlu0 %v341
    %343 = vperm.xlu0 %342, %v320
    %v344 = vpop.permute.xlu0 %343
    %v345 = vmul.f32 %v43, %v301
    %v346 = vmul.f32 %v44, %v301
    %v347 = vmul.f32 %v45, %v307
    %v348 = vmul.f32 %v46, %v307
    %v349 = vmul.f32 %v47, %v313
    %v350 = vmul.f32 %v48, %v313
    %v351 = vmul.f32 %v49, %v319
    %v352 = vmul.f32 %v50, %v319
    %v353 = vmul.f32 %v51, %v326
    %v354 = vmul.f32 %v52, %v326
    %v355 = vmul.f32 %v53, %v332
    %v356 = vmul.f32 %v54, %v332
    %v357 = vmul.f32 %v55, %v338
    %v358 = vmul.f32 %v56, %v338
    %v359 = vmul.f32 %v57, %v344
    %v360 = vmul.f32 %v58, %v344
    %361 = vst [vmem:[#allocation5] sm:$0xff] %v345
    %362 = vst [vmem:[#allocation5 + $0x8] sm:$0xff] %v346
    %363 = vst [vmem:[#allocation5 + $0x10] sm:$0xff] %v347
    %364 = vst [vmem:[#allocation5 + $0x18] sm:$0xff] %v348
    %365 = vst [vmem:[#allocation5 + $0x20] sm:$0xff] %v349
    %366 = vst [vmem:[#allocation5 + $0x28] sm:$0xff] %v350
    %367 = vst [vmem:[#allocation5 + $0x30] sm:$0xff] %v351
    %368 = vst [vmem:[#allocation5 + $0x38] sm:$0xff] %v352
    %369 = vst [vmem:[#allocation5 + $0x40] sm:$0xff] %v353
    %370 = vst [vmem:[#allocation5 + $0x48] sm:$0xff] %v354
    %371 = vst [vmem:[#allocation5 + $0x50] sm:$0xff] %v355
    %372 = vst [vmem:[#allocation5 + $0x58] sm:$0xff] %v356
    %373 = vst [vmem:[#allocation5 + $0x60] sm:$0xff] %v357
    %374 = vst [vmem:[#allocation5 + $0x68] sm:$0xff] %v358
    %375 = vst [vmem:[#allocation5 + $0x70] sm:$0xff] %v359
    %376 = vst [vmem:[#allocation5 + $0x78] sm:$0xff] %v360
    // Predicated region
    $region34: #{tpu_custom_call.1} parent=1 // pred_check
      _
    $region35: #{tpu_custom_call.1} parent=1 // pred_check_branch
      %378 = sbr.rel (0) target = $region37
    $region36: #{tpu_custom_call.1} parent=1 // pred_region
      %380 = vsyncadd [#allocation4], 0
      %s381 = sshll.u32 [#allocation5], 4
      %s382 = int_to_ptr.vmem [resolvable:$true] %s381
      %s383 = sshll.u32 %s7, 4
      %s384 = int_to_ptr.hbm [resolvable:$true] %s383
      %389 = dma.vmem_to_hbm [thread:$0]  %s382, 2048, %s384, [#allocation4], 256, 256, 16
    $region37: #{tpu_custom_call.1} parent=1 // pred_fallthru
      _
    // Predicated region
    $region38: #{tpu_custom_call.1} parent=1 // pred_check
      _
    $region39: #{tpu_custom_call.1} parent=1 // pred_check_branch
      %391 = sbr.rel (0) target = $region41
    $region40: #{tpu_custom_call.1} parent=1 // pred_region
      %393 = dma.done [#allocation4], 2048
    $region41: #{tpu_custom_call.1} parent=1 // pred_fallthru
      _
    %394 = vsyncpa [#allocation3], 1
    %395 = vsyncpa [#allocation4], 1

</llo_original>
